<compile_context>
chip_gen: v5e
topology: v5e:2x2
jax: 0.10.0
libtpu: 0.0.40
codegen_flags: <defaults>
</compile_context>

<pallas_src>
import functools
import math

import jax
import jax.numpy as jnp
from jax import lax
from jax.experimental import pallas as pl
from jax.experimental.pallas import tpu as pltpu


_NC = 2  # leading "parallel" core-split axis for pass 1 (v7x megacore; serial elsewhere)


def _round_up(x, m):
    return -(-x // m) * m


def _vmem_capacity_bytes():
    try:
        return int(pltpu.get_tpu_info().vmem_capacity_bytes)
    except Exception:
        return 64 * 1024 * 1024  # conservative default (v7x per-TC VMEM)


def _pick_pass1_tm(m, kp, cp2, vmem):
    """Largest M tile whose double-buffered blocks fit comfortably in VMEM."""
    budget = int(vmem * 0.45)
    w_db = 2 * kp * cp2 * 2                       # double-buffered bf16 weights
    tm = 8
    for cand in (2048, 1024, 512, 256, 128, 64, 32, 16, 8):
        step = 2 * cand * kp * 2 + 2 * cand * cp2 * 2 + w_db
        if step <= budget:
            tm = cand
            break
    return max(8, min(tm, _round_up(max(m, 8), 8)))


def _pick_pass2_tm(tm, mp, cp, cp2, vmem):
    """Pass 2 only streams one bf16 input + two f32 outputs -> allow bigger tiles."""
    budget = int(vmem * 0.5)
    tm2 = tm
    for mult in (16, 8, 4, 2):
        cand = tm * mult
        step = 2 * cand * cp2 * 2 + 2 * 2 * cand * cp * 4
        if mp % cand == 0 and step <= budget:
            tm2 = cand
            break
    return tm2


# ----------------------------------------------------------------------------- kernels


def _conv_stats_kernel(p_ref, w_ref, y_ref, stats_ref):
    """Fused (main || shortcut) gated conv-as-matmul for one M tile.

    p_ref:     (TM, Kp)   bf16 im2col patch tile
    w_ref:     (Kp, Cp2)  bf16 gated weights, [main | shortcut] on the lane axis
    y_ref:     (TM, Cp2)  bf16 raw conv output tile (cast once on store)
    stats_ref: (8, Cp2)   f32 per-core resident accumulator; row0=sum, row1=sumsq
    """
    @pl.when(pl.program_id(1) == 0)
    def _():
        stats_ref[...] = jnp.zeros_like(stats_ref)

    y = jnp.dot(p_ref[...], w_ref[...], preferred_element_type=jnp.float32)
    y_ref[...] = y.astype(y_ref.dtype)

    s = jnp.sum(y, axis=0, keepdims=True)
    ss = jnp.sum(y * y, axis=0, keepdims=True)
    row = lax.broadcasted_iota(jnp.int32, stats_ref.shape, 0)
    stats_ref[...] = stats_ref[...] + jnp.where(
        row == 0, s, jnp.where(row == 1, ss, 0.0))


def _bn_kernel(y_ref, stats_ref, gamma_ref, beta_ref, om_ref, os_ref, *,
               m_total, eps, cp, nc):
    """Training-mode BatchNorm2d for both branches; ReLU only on the main branch."""
    ssum = stats_ref[0:1, :]
    ssq = stats_ref[1:2, :]
    for c in range(1, nc):                       # combine per-core partials
        ssum = ssum + stats_ref[8 * c:8 * c + 1, :]
        ssq = ssq + stats_ref[8 * c + 1:8 * c + 2, :]
    inv_m = 1.0 / m_total
    mean = ssum * inv_m
    var = jnp.maximum(ssq * inv_m - mean * mean, 0.0)   # clamp rounding negatives
    scale = lax.rsqrt(var + eps) * gamma_ref[...]
    shift = beta_ref[...] - mean * scale
    z = y_ref[...].astype(jnp.float32) * scale + shift
    om_ref[...] = jnp.maximum(z[:, :cp], 0.0)            # main branch: BN + ReLU
    os_ref[...] = z[:, cp:]                               # shortcut branch: BN only


# ----------------------------------------------------------------------------- wrappers


def _im2col_s2_p1_k3(x_bf16):
    """x: (N, Cin, H, W) bf16 -> patches (N*Ho*Wo, 9*Cin) bf16, tap-major K."""
    N, Cin, H, W = x_bf16.shape
    Ho = (H + 2 - 3) // 2 + 1
    Wo = (W + 2 - 3) // 2 + 1
    xh = jnp.pad(jnp.transpose(x_bf16, (0, 2, 3, 1)),
                 ((0, 0), (1, 1), (1, 1), (0, 0)))        # (N, H+2, W+2, Cin) NHWC
    taps = []
    for kh in range(3):
        for kw in range(3):
            taps.append(lax.slice(
                xh,
                (0, kh, kw, 0),
                (N, kh + 2 * (Ho - 1) + 1, kw + 2 * (Wo - 1) + 1, Cin),
                (1, 2, 2, 1)))                            # (N, Ho, Wo, Cin)
    p = jnp.concatenate(taps, axis=-1)                    # (N, Ho, Wo, 9*Cin)
    return p.reshape(N * Ho * Wo, 9 * Cin), (N, Ho, Wo)


def fused_double_conv_bn(x, w_main, w_sc, gate_main, gate_sc,
                         gamma_main, beta_main, gamma_sc, beta_sc, eps=1e-5):
    """relu(bn(conv(x, w_main*g))) and bn(conv(x, w_sc*g_sc)), both stride=2 pad=1."""
    N, Cin, H, W = x.shape
    Cout = w_main.shape[0]
    K = Cin * 9

    patches, (N, Ho, Wo) = _im2col_s2_p1_k3(x.astype(jnp.bfloat16))
    M = N * Ho * Wo

    Kp = _round_up(K, 128)
    Cp = _round_up(Cout, 128)        # per-branch lane padding (128-aligned split point)
    Cp2 = 2 * Cp

    vmem = _vmem_capacity_bytes()
    vmem_limit = int(vmem * 0.75)
    TM = _pick_pass1_tm(M, Kp, Cp2, vmem)
    n_tiles = pl.cdiv(M, TM)
    n_per_core = pl.cdiv(n_tiles, _NC)
    Mp = _NC * n_per_core * TM       # zero-padded rows are exact: they add 0 to stats
    TM2 = _pick_pass2_tm(TM, Mp, Cp, Cp2, vmem)

    patches = jnp.pad(patches, ((0, Mp - M), (0, Kp - K)))

    # Fold the per-output-channel gates into the (tap-major) weights ONCE, wrapper side.
    def _wmat(w, g):
        wm = w.transpose(2, 3, 1, 0).reshape(K, Cout).astype(jnp.float32) * g[None, :]
        return jnp.pad(wm, ((0, Kp - K), (0, Cp - Cout)))

    wcat = jnp.concatenate([_wmat(w_main, gate_main), _wmat(w_sc, gate_sc)],
                           axis=1).astype(jnp.bfloat16)            # (Kp, Cp2)

    def _pad_c(v):
        return jnp.pad(v.astype(jnp.float32), (0, Cp - Cout))

    gamma = jnp.concatenate([_pad_c(gamma_main), _pad_c(gamma_sc)]).reshape(1, Cp2)
    beta = jnp.concatenate([_pad_c(beta_main), _pad_c(beta_sc)]).reshape(1, Cp2)

    conv_cost = pl.CostEstimate(
        flops=2 * Mp * Kp * Cp2,
        transcendentals=0,
        bytes_accessed=Mp * Kp * 2 + Kp * Cp2 * 2 + Mp * Cp2 * 2 + _NC * 8 * Cp2 * 4)

    # Pass 1: fused matmul for both branches + per-core resident sum / sumsq.
    y_raw, stats = pl.pallas_call(
        _conv_stats_kernel,
        out_shape=(jax.ShapeDtypeStruct((Mp, Cp2), jnp.bfloat16),
                   jax.ShapeDtypeStruct((_NC * 8, Cp2), jnp.float32)),
        grid=(_NC, n_per_core),
        in_specs=[
            pl.BlockSpec((TM, Kp), lambda c, i: (c * n_per_core + i, 0)),
            pl.BlockSpec((Kp, Cp2), lambda c, i: (0, 0)),
        ],
        out_specs=(
            pl.BlockSpec((TM, Cp2), lambda c, i: (c * n_per_core + i, 0)),
            pl.BlockSpec((8, Cp2), lambda c, i: (c, 0)),   # resident per-core slab
        ),
        compiler_params=pltpu.CompilerParams(
            dimension_semantics=("parallel", "arbitrary"),
            vmem_limit_bytes=vmem_limit),
        cost_estimate=conv_cost,
    )(patches, wcat)

    # Pass 2: tiled BN (+ ReLU on main), two separate lane-dense outputs.
    bn_kern = functools.partial(_bn_kernel, m_total=float(M), eps=eps, cp=Cp, nc=_NC)
    out_main_p, out_sc_p = pl.pallas_call(
        bn_kern,
        out_shape=(jax.ShapeDtypeStruct((Mp, Cp), jnp.float32),
                   jax.ShapeDtypeStruct((Mp, Cp), jnp.float32)),
        grid=(Mp // TM2,),
        in_specs=[
            pl.BlockSpec((TM2, Cp2), lambda i: (i, 0)),
            pl.BlockSpec((_NC * 8, Cp2), lambda i: (0, 0)),
            pl.BlockSpec((1, Cp2), lambda i: (0, 0)),
            pl.BlockSpec((1, Cp2), lambda i: (0, 0)),
        ],
        out_specs=(
            pl.BlockSpec((TM2, Cp), lambda i: (i, 0)),
            pl.BlockSpec((TM2, Cp), lambda i: (i, 0)),
        ),
        compiler_params=pltpu.CompilerParams(
            dimension_semantics=("parallel",),
            vmem_limit_bytes=vmem_limit),
    )(y_raw, stats, gamma, beta)

    out_main = out_main_p[:M, :Cout].reshape(N, Ho, Wo, Cout).transpose(0, 3, 1, 2)
    out_sc = out_sc_p[:M, :Cout].reshape(N, Ho, Wo, Cout).transpose(0, 3, 1, 2)
    return out_main, out_sc


def convolution6_forward(params, x, epoch, gate, shortcut_gate, i):
    """Mirrors Convolution6.forward (requires_grad toggling has no forward effect)."""
    Cout = params["weights"].shape[0]
    if epoch >= 4 and i == 0:
        # Few-KB per-channel reduction: plain XLA beats a pallas_call dispatch here.
        data0 = jnp.mean(params["weights"].reshape(Cout, -1), axis=1)
        data1 = jnp.mean(params["shortcut_weights"].reshape(Cout, -1), axis=1)
        return data0, data1
    if epoch < 4:
        g = jnp.ones((Cout,), jnp.float32)
        sg = jnp.ones((Cout,), jnp.float32)
    else:  # epoch >= 4: even/odd epochs compute identical forward values
        g = gate.astype(jnp.float32)
        sg = shortcut_gate.astype(jnp.float32)
    return fused_double_conv_bn(
        x, params["weights"], params["shortcut_weights"], g, sg,
        params["bn_gamma"], params["bn_beta"],
        params["sc_bn_gamma"], params["sc_bn_beta"])


# ----------------------------------------------------------------------------- params & main


def init_params(key, in_features, out_features):
    k0, k1 = jax.random.split(key)
    fan_out = out_features * 3 * 3                      # kaiming_normal_ mode='fan_out'
    std = math.sqrt(2.0 / fan_out)                      # nonlinearity='relu'
    shape = (out_features, in_features, 3, 3)
    return {
        "weights": std * jax.random.normal(k0, shape, jnp.float32),
        "shortcut_weights": std * jax.random.normal(k1, shape, jnp.float32),
        "bn_gamma": jnp.ones((out_features,), jnp.float32),
        "bn_beta": jnp.zeros((out_features,), jnp.float32),
        "sc_bn_gamma": jnp.ones((out_features,), jnp.float32),
        "sc_bn_beta": jnp.zeros((out_features,), jnp.float32),
    }


def _reference_branch(x, w, gate, gamma, beta, apply_relu, eps=1e-5):
    wg = w * gate[:, None, None, None]
    y = lax.conv_general_dilated(
        x, wg, window_strides=(2, 2), padding=((1, 1), (1, 1)),
        dimension_numbers=("NCHW", "OIHW", "NCHW"))
    mean = jnp.mean(y, axis=(0, 2, 3), keepdims=True)
    var = jnp.mean((y - mean) ** 2, axis=(0, 2, 3), keepdims=True)
    y = (y - mean) * lax.rsqrt(var + eps)
    y = y * gamma[None, :, None, None] + beta[None, :, None, None]
    return jnp.maximum(y, 0.0) if apply_relu else y


if __name__ == "__main__":
    key = jax.random.PRNGKey(0)
    kx, kp, kg, ksg = jax.random.split(key, 4)

    N, Cin, H, W = 2, 4, 16, 16
    Cout = 8
    x = jax.random.normal(kx, (N, Cin, H, W), jnp.float32)
    params = init_params(kp, Cin, Cout)
    gate = jax.nn.sigmoid(jax.random.normal(kg, (Cout,), jnp.float32))
    shortcut_gate = jax.nn.sigmoid(jax.random.normal(ksg, (Cout,), jnp.float32))

    # epoch < 4 branch (ungated convs)
    out_a, sc_a = convolution6_forward(params, x, epoch=0, gate=gate,
                                       shortcut_gate=shortcut_gate, i=1)
    # epoch >= 4, i == 0 branch (per-channel weight means)
    d0, d1 = convolution6_forward(params, x, epoch=4, gate=gate,
                                  shortcut_gate=shortcut_gate, i=0)
    # epoch >= 4, i != 0 branch (gated convs)
    out_b, sc_b = convolution6_forward(params, x, epoch=5, gate=gate,
                                       shortcut_gate=shortcut_gate, i=1)

    jax.block_until_ready((out_a, sc_a, d0, d1, out_b, sc_b))

    # Light correctness checks against plain-JAX f32 references
    # (MXU operands and the y intermediate are bf16, so tolerances are a few 1e-2
    # on unit-scale BN outputs).
    ones = jnp.ones((Cout,), jnp.float32)
    ref_out_a = _reference_branch(x, params["weights"], ones,
                                  params["bn_gamma"], params["bn_beta"], True)
    ref_sc_a = _reference_branch(x, params["shortcut_weights"], ones,
                                 params["sc_bn_gamma"], params["sc_bn_beta"], False)
    ref_out_b = _reference_branch(x, params["weights"], gate,
                                  params["bn_gamma"], params["bn_beta"], True)
    ref_sc_b = _reference_branch(x, params["shortcut_weights"], shortcut_gate,
                                 params["sc_bn_gamma"], params["sc_bn_beta"], False)
    ref_d0 = jnp.mean(params["weights"].reshape(Cout, -1), axis=1)

    assert out_a.shape == (N, Cout, H // 2, W // 2)
    assert sc_a.shape == (N, Cout, H // 2, W // 2)
    assert jnp.max(jnp.abs(out_a - ref_out_a)) < 5e-2
    assert jnp.max(jnp.abs(sc_a - ref_sc_a)) < 5e-2
    assert jnp.max(jnp.abs(out_b - ref_out_b)) < 5e-2
    assert jnp.max(jnp.abs(sc_b - ref_sc_b)) < 5e-2
    assert jnp.max(jnp.abs(d0 - ref_d0)) < 1e-5

    print("KERNEL_OK")
</pallas_src>

<mosaic_0001>
module attributes {stable_mosaic.version = 11 : i64} {
  func.func @_conv_stats_kernel(%arg0: i32, %arg1: i32, %arg2: memref<128x128xbf16, #tpu.memory_space<vmem>>, %arg3: memref<128x256xbf16, #tpu.memory_space<vmem>>, %arg4: memref<128x256xbf16, #tpu.memory_space<vmem>>, %arg5: memref<8x256xf32, #tpu.memory_space<vmem>>) attributes {dimension_semantics = [#tpu.dimension_semantics<parallel>, #tpu.dimension_semantics<arbitrary>], iteration_bounds = array<i64: 2, 1>, scalar_prefetch = 0 : i64, scratch_operands = 0 : i64, tpu.core_type = #tpu.core_type<tc>, window_params = [{transform_indices = @transform_0, window_bounds = array<i64: 128, 128>}, {pipeline_mode = #tpu.pipeline_mode<synchronous>, transform_indices = @transform_1, window_bounds = array<i64: 128, 256>}, {transform_indices = @transform_2, window_bounds = array<i64: 128, 256>}, {transform_indices = @transform_3, window_bounds = array<i64: 8, 256>}]} {
    %c0_i32 = arith.constant 0 : i32
    %0 = arith.cmpi eq, %arg1, %c0_i32 : i32
    %1 = arith.extui %0 : i1 to i32
    %c0_i32_0 = arith.constant 0 : i32
    %2 = arith.cmpi ne, %1, %c0_i32_0 : i32
    scf.if %2 {
      %cst_14 = arith.constant 0.000000e+00 : f32
      %28 = vector.broadcast %cst_14 : f32 to vector<8x256xf32>
      %c0_15 = arith.constant 0 : index
      %c0_16 = arith.constant 0 : index
      %29 = vector.load %arg5[%c0_15, %c0_16] : memref<8x256xf32, #tpu.memory_space<vmem>>, vector<8x256xf32>
      tpu.vector_store %arg5[%c0_15, %c0_16], %28 {strides = array<i32>} : memref<8x256xf32, #tpu.memory_space<vmem>>, vector<8x256xf32>,
    } else {
    }
    %c0 = arith.constant 0 : index
    %c0_1 = arith.constant 0 : index
    %3 = vector.load %arg2[%c0, %c0_1] : memref<128x128xbf16, #tpu.memory_space<vmem>>, vector<128x128xbf16>
    %c0_2 = arith.constant 0 : index
    %c0_3 = arith.constant 0 : index
    %4 = vector.load %arg3[%c0_2, %c0_3] : memref<128x256xbf16, #tpu.memory_space<vmem>>, vector<128x256xbf16>
    %cst = arith.constant dense<0.000000e+00> : vector<128x256xf32>
    %5 = tpu.matmul %3, %4, %cst {dimension_numbers = #tpu.dot_dimension_numbers<[1], [0], [0], [1], [0, 0, 1, 1], [], []>} : vector<128x128xbf16>, vector<128x256xbf16>, vector<128x256xf32> -> vector<128x256xf32>
    %6 = arith.truncf %5 : vector<128x256xf32> to vector<128x256xbf16>
    %c0_4 = arith.constant 0 : index
    %c0_5 = arith.constant 0 : index
    %7 = vector.load %arg4[%c0_4, %c0_5] : memref<128x256xbf16, #tpu.memory_space<vmem>>, vector<128x256xbf16>
    tpu.vector_store %arg4[%c0_4, %c0_5], %6 {strides = array<i32>} : memref<128x256xbf16, #tpu.memory_space<vmem>>, vector<128x256xbf16>,
    %cst_6 = arith.constant dense<0.000000e+00> : vector<256xf32>
    %8 = vector.multi_reduction <add>, %5, %cst_6 [0] : vector<128x256xf32> to vector<256xf32>
    %9 = vector.shape_cast %8 : vector<256xf32> to vector<1x256xf32>
    %10 = arith.mulf %5, %5 : vector<128x256xf32>
    %cst_7 = arith.constant dense<0.000000e+00> : vector<256xf32>
    %11 = vector.multi_reduction <add>, %10, %cst_7 [0] : vector<128x256xf32> to vector<256xf32>
    %12 = vector.shape_cast %11 : vector<256xf32> to vector<1x256xf32>
    %13 = tpu.iota {dimensions = array<i32: 0>} : vector<8x256xi32>
    %c0_8 = arith.constant 0 : index
    %c0_9 = arith.constant 0 : index
    %14 = vector.load %arg5[%c0_8, %c0_9] : memref<8x256xf32, #tpu.memory_space<vmem>>, vector<8x256xf32>
    %c0_i32_10 = arith.constant 0 : i32
    %15 = vector.broadcast %c0_i32_10 : i32 to vector<8x256xi32>
    %16 = arith.cmpi eq, %13, %15 : vector<8x256xi32>
    %c1_i32 = arith.constant 1 : i32
    %17 = vector.broadcast %c1_i32 : i32 to vector<8x256xi32>
    %18 = arith.cmpi eq, %13, %17 : vector<8x256xi32>
    %cst_11 = arith.constant 0.000000e+00 : f32
    %19 = vector.shape_cast %12 : vector<1x256xf32> to vector<1x256xf32>
    %20 = vector.broadcast %19 : vector<1x256xf32> to vector<8x256xf32>
    %21 = vector.broadcast %cst_11 : f32 to vector<8x256xf32>
    %22 = arith.select %18, %20, %21 : vector<8x256xi1>, vector<8x256xf32>
    %23 = vector.shape_cast %9 : vector<1x256xf32> to vector<1x256xf32>
    %24 = vector.broadcast %23 : vector<1x256xf32> to vector<8x256xf32>
    %25 = arith.select %16, %24, %22 : vector<8x256xi1>, vector<8x256xf32>
    %26 = arith.addf %14, %25 : vector<8x256xf32>
    %c0_12 = arith.constant 0 : index
    %c0_13 = arith.constant 0 : index
    %27 = vector.load %arg5[%c0_12, %c0_13] : memref<8x256xf32, #tpu.memory_space<vmem>>, vector<8x256xf32>
    tpu.vector_store %arg5[%c0_12, %c0_13], %26 {strides = array<i32>} : memref<8x256xf32, #tpu.memory_space<vmem>>, vector<8x256xf32>,
    return
  }
  func.func @transform_0(%arg0: i32, %arg1: i32) -> (i32, i32) {
    %c1_i32 = arith.constant 1 : i32
    %0 = arith.muli %arg0, %c1_i32 : i32
    %1 = arith.addi %0, %arg1 : i32
    %c0_i32 = arith.constant 0 : i32
    %c0_i32_0 = arith.constant 0 : i32
    return %1, %c0_i32 : i32, i32
  }
  func.func @transform_1(%arg0: i32, %arg1: i32) -> (i32, i32) {
    %c0_i32 = arith.constant 0 : i32
    %c0_i32_0 = arith.constant 0 : i32
    %c0_i32_1 = arith.constant 0 : i32
    return %c0_i32, %c0_i32_0 : i32, i32
  }
  func.func @transform_2(%arg0: i32, %arg1: i32) -> (i32, i32) {
    %c1_i32 = arith.constant 1 : i32
    %0 = arith.muli %arg0, %c1_i32 : i32
    %1 = arith.addi %0, %arg1 : i32
    %c0_i32 = arith.constant 0 : i32
    %c0_i32_0 = arith.constant 0 : i32
    return %1, %c0_i32 : i32, i32
  }
  func.func @transform_3(%arg0: i32, %arg1: i32) -> (i32, i32) {
    %c0_i32 = arith.constant 0 : i32
    %c0_i32_0 = arith.constant 0 : i32
    return %arg0, %c0_i32 : i32, i32
  }
}

</mosaic_0001>

<llo_original>
// kernel: tpu_custom_call.1
$region0: #{tpu_custom_call.1}
  #allocation0 [shape = 'u32[]', space=smem, size = 0x4, offset = 0x4, fixed_abs, tag = 'smem constant byte address 0x4 - core index']
  #allocation1 [shape = 'u32[72,128]{1,0:T(1,128)}', space=vmem, size = 0x9000, scoped, tag = 'internal scratch']
  %s0 = inlined_call_operand.hbm [shape: bf16[256,128], index: 0, kind: input, shape index: {}]
  %s1 = inlined_call_operand.hbm [shape: bf16[128,256], index: 1, kind: input, shape index: {}]
  %s2 = inlined_call_operand.hbm [shape: bf16[256,256], index: 2, kind: output, shape index: {0}]
  %s3 = inlined_call_operand.hbm [shape: f32[16,256], index: 3, kind: output, shape index: {1}]
  %4 = xla_tuple %s2, %s3
  %s5 = sld [smem:[#allocation0]]
  $region61: #{tpu_custom_call.1} parent=0
    _
  %s7 = ssub.s32 1, %s5
  %s8 = scalar_select 0, %s7, %s5
  $region1: #{tpu_custom_call.1} parent=0
    #allocation2 [shape = 'u8[65536]{0}', space=vmem, size = 0x10000, scoped, tag = 'input window, operand 0']
    #allocation3 [shape = 's32[2]{0}', space=sflag, size = 0x8, scoped, tag = 'scoped memory for tpu_custom_call.1']
    #allocation4 [shape = 's32[2]{0}', space=sflag, size = 0x8, scoped, tag = 'scoped memory for tpu_custom_call.1']
    #allocation5 [shape = 'u8[65536]{0}', space=vmem, size = 0x10000, scoped, tag = 'input window, operand 1, single buffered']
    #allocation6 [shape = 's32[1]{0}', space=sflag, size = 0x4, scoped, tag = 'scoped memory for tpu_custom_call.1']
    #allocation7 [shape = 'u8[131072]{0}', space=vmem, size = 0x20000, scoped, tag = 'output window, operand 0']
    #allocation8 [shape = 'u8[16384]{0}', space=vmem, size = 0x4000, scoped, tag = 'output window, operand 1']
    #allocation9 [shape = 's32[2]{0}', space=sflag, size = 0x8, scoped, tag = 'scoped memory for tpu_custom_call.1']
    %9 = vsyncpa [#allocation3], 0
    %s10 = scalar_lea.sflag [#allocation3], 1
    %11 = vsyncpa %s10, 0
    %12 = vsyncpa [#allocation6], 0
    %13 = vsyncpa [#allocation4], 0
    %s14 = scalar_lea.sflag [#allocation4], 1
    %15 = vsyncpa %s14, 0
    %16 = vsyncpa [#allocation9], 0
    %s17 = scalar_lea.sflag [#allocation9], 1
    %18 = vsyncpa %s17, 0
    loop: start=0, step=1, limit=4
    $region2: #{tpu_custom_call.1} parent=1 // loop_pre_header
      _
    $region3: #{tpu_custom_call.1} parent=1 // loop_header
      %s20 = sphi 0, %s24
      %p21 = scmp.ge.s32.totalorder %s20, 4
      %s27 = sphi 0, %s39
      %s28 = sphi 0, %s35
      %s29 = sphi 0, %s27
      %s30 = sphi 0, %s28
      %s31 = sphi 0, %s29
      %s32 = sphi 0, %s30
      %s44 = sphi 0, %s46
      %s47 = sphi 0, %s44
      %s48 = sphi 0, %s47
      %s64 = sphi 0, %s48
      %s68 = sphi 0, %s68
      %s70 = sphi 0, %s68
      %s71 = sphi 0, %s70
      %s85 = sphi 0, %s71
      %s93 = sphi 0, %s95
      %s96 = sphi 0, %s93
      %s97 = sphi 0, %s96
      %s113 = sphi 0, %s97
      %s119 = sphi 0, %s121
      %s122 = sphi 0, %s119
      %s123 = sphi 0, %s122
      %s139 = sphi 0, %s123
    $region4: #{tpu_custom_call.1} parent=1 // loop_header_branch
      %23 = sbr.rel (%p21) target = $region8
    $region5: #{tpu_custom_call.1} parent=1 // loop_body
      %s25 = ssub.s32 %s20, 1
      %s26 = ssub.s32 %s20, 2
      %s33 = sadd.s32 1, %s28
      %p34 = scmp.ge.s32.totalorder %s33, 1
      %s35 = scalar_select %p34, 0, %s33
      %s36 = sadd.s32 1, %s27
      %s37 = scalar_select %p34, %s36, %s27
      %p38 = scmp.ge.s32.totalorder %s37, 2
      %s39 = scalar_select %p38, 0, %s37
      %s40 = sadd.s32 %s27, %s28
      %s41 = sadd.s32 %s39, %s35
      %s42 = ssub.s32 %s40, %s41
      %p43 = scmp.eq.s32.totalorder %s42, 0
      %s45 = sadd.s32 %s44, 1
      %s46 = scalar_select %p43, %s44, %s45
      %p49 = pneg %p43
      %p50 = scmp.eq.s32.totalorder %s20, 1
      %p51 = por %p49, %p50
      %p52 = scmp.ne.s32.totalorder %s44, %s47
      %p53 = scmp.eq.s32.totalorder %s20, 0
      %p54 = por %p52, %p53
      %p55 = scmp.ne.s32.totalorder %s44, %s47
      %p56 = scmp.eq.s32.totalorder %s25, 1
      %p57 = por %p55, %p56
      %p58 = scmp.ne.s32.totalorder %s47, %s48
      %p59 = scmp.eq.s32.totalorder %s25, 0
      %p60 = por %p58, %p59
      %p61 = scmp.ne.s32.totalorder %s47, %s48
      %p62 = scmp.eq.s32.totalorder %s26, 1
      %p63 = por %p61, %p62
      %p65 = scmp.ne.s32.totalorder %s48, %s64
      %p66 = scmp.eq.s32.totalorder %s26, 0
      %p67 = por %p65, %p66
      %s69 = sadd.s32 %s68, 1
      %p72 = scmp.eq.s32.totalorder %s20, 1
      %p73 = scmp.ne.s32.totalorder %s68, %s70
      %p74 = scmp.eq.s32.totalorder %s20, 0
      %p75 = por %p73, %p74
      %p76 = scmp.ne.s32.totalorder %s68, %s70
      %p77 = scmp.eq.s32.totalorder %s25, 1
      %p78 = por %p76, %p77
      %p79 = scmp.ne.s32.totalorder %s70, %s71
      %p80 = scmp.eq.s32.totalorder %s25, 0
      %p81 = por %p79, %p80
      %p82 = scmp.ne.s32.totalorder %s70, %s71
      %p83 = scmp.eq.s32.totalorder %s26, 1
      %p84 = por %p82, %p83
      %p86 = scmp.ne.s32.totalorder %s71, %s85
      %p87 = scmp.eq.s32.totalorder %s26, 0
      %p88 = por %p86, %p87
      %s89 = sadd.s32 %s27, %s28
      %s90 = sadd.s32 %s39, %s35
      %s91 = ssub.s32 %s89, %s90
      %p92 = scmp.eq.s32.totalorder %s91, 0
      %s94 = sadd.s32 %s93, 1
      %s95 = scalar_select %p92, %s93, %s94
      %p98 = pneg %p92
      %p99 = scmp.eq.s32.totalorder %s20, 1
      %p100 = por %p98, %p99
      %p101 = scmp.ne.s32.totalorder %s93, %s96
      %p102 = scmp.eq.s32.totalorder %s20, 0
      %p103 = por %p101, %p102
      %p104 = scmp.ne.s32.totalorder %s93, %s96
      %p105 = scmp.eq.s32.totalorder %s25, 1
      %p106 = por %p104, %p105
      %p107 = scmp.ne.s32.totalorder %s96, %s97
      %p108 = scmp.eq.s32.totalorder %s25, 0
      %p109 = por %p107, %p108
      %p110 = scmp.ne.s32.totalorder %s96, %s97
      %p111 = scmp.eq.s32.totalorder %s26, 1
      %p112 = por %p110, %p111
      %p114 = scmp.ne.s32.totalorder %s97, %s113
      %p115 = scmp.eq.s32.totalorder %s26, 0
      %p116 = por %p114, %p115
      %s117 = ssub.s32 %s27, %s39
      %p118 = scmp.eq.s32.totalorder %s117, 0
      %s120 = sadd.s32 %s119, 1
      %s121 = scalar_select %p118, %s119, %s120
      %p124 = pneg %p118
      %p125 = scmp.eq.s32.totalorder %s20, 1
      %p126 = por %p124, %p125
      %p127 = scmp.ne.s32.totalorder %s119, %s122
      %p128 = scmp.eq.s32.totalorder %s20, 0
      %p129 = por %p127, %p128
      %p130 = scmp.ne.s32.totalorder %s119, %s122
      %p131 = scmp.eq.s32.totalorder %s25, 1
      %p132 = por %p130, %p131
      %p133 = scmp.ne.s32.totalorder %s122, %s123
      %p134 = scmp.eq.s32.totalorder %s25, 0
      %p135 = por %p133, %p134
      %p136 = scmp.ne.s32.totalorder %s122, %s123
      %p137 = scmp.eq.s32.totalorder %s26, 1
      %p138 = por %p136, %p137
      %p140 = scmp.ne.s32.totalorder %s123, %s139
      %p141 = scmp.eq.s32.totalorder %s26, 0
      %p142 = por %p140, %p141
      %p143 = scmp.le.s32.totalorder 1, %s20
      %p144 = scmp.lt.s32.totalorder %s20, 3
      %p145 = pnand %p143, %p144
      %p146 = pneg %p145
      // Predicated region
      $region9: #{tpu_custom_call.1} parent=5 // pred_check
        _
      $region10: #{tpu_custom_call.1} parent=5 // pred_check_branch
        %148 = sbr.rel (%p145) target = $region12
      $region11: #{tpu_custom_call.1} parent=5 // pred_region
        %s149 = ssub.s32 %s20, 1
        // Predicated region
        $region13: #{tpu_custom_call.1} parent=11 // pred_check
          %p150 = pneg %p81
        $region14: #{tpu_custom_call.1} parent=11 // pred_check_branch
          %152 = sbr.rel (%p150) target = $region16
        $region15: #{tpu_custom_call.1} parent=11 // pred_region
          %154 = vsyncadd [#allocation6], 0
          %s155 = sshll.u32 %s1, 4
          %s156 = int_to_ptr.hbm [resolvable:$true] %s155
          %s157 = sshll.u32 [#allocation5], 4
          %s158 = int_to_ptr.vmem [resolvable:$true] %s157
          %163 = dma.hbm_to_vmem [thread:$0]  %s156, 2048, %s158, [#allocation6], 128, 128, 8
        $region16: #{tpu_custom_call.1} parent=11 // pred_fallthru
          _
      $region12: #{tpu_custom_call.1} parent=5 // pred_fallthru
        _
      %p164 = scmp.lt.s32.totalorder %s20, 2
      // Predicated region
      $region17: #{tpu_custom_call.1} parent=5 // pred_check
        %p165 = pneg %p164
      $region18: #{tpu_custom_call.1} parent=5 // pred_check_branch
        %167 = sbr.rel (%p165) target = $region20
      $region19: #{tpu_custom_call.1} parent=5 // pred_region
        // Predicated region
        $region21: #{tpu_custom_call.1} parent=19 // pred_check
          %p168 = pneg %p54
        $region22: #{tpu_custom_call.1} parent=19 // pred_check_branch
          %170 = sbr.rel (%p168) target = $region24
        $region23: #{tpu_custom_call.1} parent=19 // pred_region
          %s171 = sand.u32 %s44, 1
          %s172 = scalar_lea.sflag [#allocation3], %s171
          %s173 = sand.u32 %s44, 1
          %s174 = smul.addr %s173, 64
          %s175 = scalar_lea.vmem [#allocation2], %s174
          %s176 = sadd.s32 %s27, %s28
          %s177 = smul.u32 16, %s176
          %179 = vsyncadd %s172, 0
          %s180 = smul.addr %s177, 4
          %s181 = scalar_lea.hbm %s0, %s180
          %s182 = sshll.u32 %s181, 4
          %s183 = int_to_ptr.hbm [resolvable:$true] %s182
          %s184 = sshll.u32 %s175, 4
          %s185 = int_to_ptr.vmem [resolvable:$true] %s184
          %190 = dma.hbm_to_vmem [thread:$0]  %s183, 1024, %s185, %s172, 64, 64, 4
        $region24: #{tpu_custom_call.1} parent=19 // pred_fallthru
          _
      $region20: #{tpu_custom_call.1} parent=5 // pred_fallthru
        _
      %p191 = scmp.le.s32.totalorder 1, %s20
      %p192 = scmp.lt.s32.totalorder %s20, 3
      %p193 = pnand %p191, %p192
      %p194 = pneg %p193
      // Predicated region
      $region25: #{tpu_custom_call.1} parent=5 // pred_check
        _
      $region26: #{tpu_custom_call.1} parent=5 // pred_check_branch
        %196 = sbr.rel (%p193) target = $region28
      $region27: #{tpu_custom_call.1} parent=5 // pred_region
        %s197 = ssub.s32 %s20, 1
        %s198 = sand.u32 %s47, 1
        %s199 = scalar_lea.sflag [#allocation3], %s198
        %s200 = sand.u32 %s47, 1
        %s201 = smul.addr %s200, 64
        %s202 = scalar_lea.vmem [#allocation2], %s201
        // Predicated region
        $region29: #{tpu_custom_call.1} parent=27 // pred_check
          %p203 = pneg %p60
        $region30: #{tpu_custom_call.1} parent=27 // pred_check_branch
          %205 = sbr.rel (%p203) target = $region32
        $region31: #{tpu_custom_call.1} parent=27 // pred_region
          %207 = dma.done %s199, 1024
        $region32: #{tpu_custom_call.1} parent=27 // pred_fallthru
          _
        // Predicated region
        $region33: #{tpu_custom_call.1} parent=27 // pred_check
          %p208 = pneg %p81
        $region34: #{tpu_custom_call.1} parent=27 // pred_check_branch
          %210 = sbr.rel (%p208) target = $region36
        $region35: #{tpu_custom_call.1} parent=27 // pred_region
          %212 = dma.done [#allocation6], 2048
        $region36: #{tpu_custom_call.1} parent=27 // pred_fallthru
          _
        %s213 = sand.u32 %s47, 1
        %s214 = scalar_lea.sflag [#allocation3], %s213
        %s215 = sand.u32 %s47, 1
        %s216 = smul.addr %s215, 64
        %s217 = scalar_lea.vmem [#allocation2], %s216
        %p218 = pneg %p60
        %p219 = pneg %p57
        %p220 = pneg %p81
        %p221 = pneg %p78
        %p222 = pneg %p109
        %p223 = pneg %p106
        %s224 = sand.u32 %s96, 1
        %s225 = scalar_lea.sflag [#allocation4], %s224
        %s226 = sand.u32 %s96, 1
        %s227 = smul.addr %s226, 128
        %s228 = scalar_lea.vmem [#allocation7], %s227
        %p229 = pneg %p135
        %p230 = pneg %p132
        %s231 = sand.u32 %s122, 1
        %s232 = scalar_lea.sflag [#allocation9], %s231
        %s233 = sand.u32 %s122, 1
        %s234 = smul.addr %s233, 16
        %s235 = scalar_lea.vmem [#allocation8], %s234
        %s236 = sadd.s32 %s29, %s30
        %s237 = smul.u32 16, %s236
        %s238 = sadd.s32 %s29, %s30
        %s239 = smul.u32 16, %s238
        %p240 = scmp.eq.s32.totalorder %s30, 0
        // Predicated region
        $region37: #{tpu_custom_call.1} parent=27 // pred_check
          %p241 = pneg %p240
        $region38: #{tpu_custom_call.1} parent=27 // pred_check_branch
          %243 = sbr.rel (%p241) target = $region40
        $region39: #{tpu_custom_call.1} parent=27 // pred_region
          %244 = vst [vmem:[%s235] sm:$0xff] 0.0
          %245 = vst [vmem:[%s235 + $0x8] sm:$0xff] 0.0
        $region40: #{tpu_custom_call.1} parent=27 // pred_fallthru
          _
        %v246 = vld [vmem:[%s202] sm:$0xf]
        %v247 = vld [vmem:[%s202 + $0x4] sm:$0xf]
        %v248 = vld [vmem:[%s202 + $0x8] sm:$0xf]
        %v249 = vld [vmem:[%s202 + $0xc] sm:$0xf]
        %v250 = vld [vmem:[%s202 + $0x10] sm:$0xf]
        %v251 = vld [vmem:[%s202 + $0x14] sm:$0xf]
        %v252 = vld [vmem:[%s202 + $0x18] sm:$0xf]
        %v253 = vld [vmem:[%s202 + $0x1c] sm:$0xf]
        %v254 = vld [vmem:[%s202 + $0x20] sm:$0xf]
        %v255 = vld [vmem:[%s202 + $0x24] sm:$0xf]
        %v256 = vld [vmem:[%s202 + $0x28] sm:$0xf]
        %v257 = vld [vmem:[%s202 + $0x2c] sm:$0xf]
        %v258 = vld [vmem:[%s202 + $0x30] sm:$0xf]
        %v259 = vld [vmem:[%s202 + $0x34] sm:$0xf]
        %v260 = vld [vmem:[%s202 + $0x38] sm:$0xf]
        %v261 = vld [vmem:[%s202 + $0x3c] sm:$0xf]
        %v262 = vld [vmem:[#allocation5] sm:$0xff]
        %v263 = vld [vmem:[#allocation5 + $0x8] sm:$0xff]
        %v264 = vld [vmem:[#allocation5 + $0x10] sm:$0xff]
        %v265 = vld [vmem:[#allocation5 + $0x18] sm:$0xff]
        %v266 = vld [vmem:[#allocation5 + $0x20] sm:$0xff]
        %v267 = vld [vmem:[#allocation5 + $0x28] sm:$0xff]
        %v268 = vld [vmem:[#allocation5 + $0x30] sm:$0xff]
        %v269 = vld [vmem:[#allocation5 + $0x38] sm:$0xff]
        %v270 = vld [vmem:[#allocation5 + $0x40] sm:$0xff]
        %v271 = vld [vmem:[#allocation5 + $0x48] sm:$0xff]
        %v272 = vld [vmem:[#allocation5 + $0x50] sm:$0xff]
        %v273 = vld [vmem:[#allocation5 + $0x58] sm:$0xff]
        %v274 = vld [vmem:[#allocation5 + $0x60] sm:$0xff]
        %v275 = vld [vmem:[#allocation5 + $0x68] sm:$0xff]
        %v276 = vld [vmem:[#allocation5 + $0x70] sm:$0xff]
        %v277 = vld [vmem:[#allocation5 + $0x78] sm:$0xff]
        %v294 = vunpack.c.l.b16 %v246
        %v295 = vunpack.c.l.b16 %v247
        %v296 = vunpack.c.l.b16 %v248
        %v297 = vunpack.c.l.b16 %v249
        %v298 = vunpack.c.l.b16 %v250
        %v299 = vunpack.c.l.b16 %v251
        %v300 = vunpack.c.l.b16 %v252
        %v301 = vunpack.c.l.b16 %v253
        %v302 = vunpack.c.l.b16 %v254
        %v303 = vunpack.c.l.b16 %v255
        %v304 = vunpack.c.l.b16 %v256
        %v305 = vunpack.c.l.b16 %v257
        %v306 = vunpack.c.l.b16 %v258
        %v307 = vunpack.c.l.b16 %v259
        %v308 = vunpack.c.l.b16 %v260
        %v309 = vunpack.c.l.b16 %v261
        %v310 = vpack.c.b16 %v295, %v294
        %v311 = vpack.c.b16 %v297, %v296
        %v312 = vpack.c.b16 %v299, %v298
        %v313 = vpack.c.b16 %v301, %v300
        %v314 = vpack.c.b16 %v303, %v302
        %v315 = vpack.c.b16 %v305, %v304
        %v316 = vpack.c.b16 %v307, %v306
        %v317 = vpack.c.b16 %v309, %v308
        %v342 = vunpack.c.l.b16 %v262
        %v343 = vunpack.c.h.b16 %v262
        %v344 = vunpack.c.l.b16 %v263
        %v345 = vunpack.c.h.b16 %v263
        %v346 = vunpack.c.l.b16 %v264
        %v347 = vunpack.c.h.b16 %v264
        %v348 = vunpack.c.l.b16 %v265
        %v349 = vunpack.c.h.b16 %v265
        %v350 = vunpack.c.l.b16 %v266
        %v351 = vunpack.c.h.b16 %v266
        %v352 = vunpack.c.l.b16 %v267
        %v353 = vunpack.c.h.b16 %v267
        %v354 = vunpack.c.l.b16 %v268
        %v355 = vunpack.c.h.b16 %v268
        %v356 = vunpack.c.l.b16 %v269
        %v357 = vunpack.c.h.b16 %v269
        %v358 = vunpack.c.l.b16 %v270
        %v359 = vunpack.c.h.b16 %v270
        %v360 = vunpack.c.l.b16 %v271
        %v361 = vunpack.c.h.b16 %v271
        %v362 = vunpack.c.l.b16 %v272
        %v363 = vunpack.c.h.b16 %v272
        %v364 = vunpack.c.l.b16 %v273
        %v365 = vunpack.c.h.b16 %v273
        %v366 = vunpack.c.l.b16 %v274
        %v367 = vunpack.c.h.b16 %v274
        %v368 = vunpack.c.l.b16 %v275
        %v369 = vunpack.c.h.b16 %v275
        %v370 = vunpack.c.l.b16 %v276
        %v371 = vunpack.c.h.b16 %v276
        %v372 = vunpack.c.l.b16 %v277
        %v373 = vunpack.c.h.b16 %v277
        %v374 = vpack.c.b16 %v344, %v342
        %v375 = vpack.c.b16 %v345, %v343
        %v376 = vpack.c.b16 %v348, %v346
        %v377 = vpack.c.b16 %v349, %v347
        %v378 = vpack.c.b16 %v352, %v350
        %v379 = vpack.c.b16 %v353, %v351
        %v380 = vpack.c.b16 %v356, %v354
        %v381 = vpack.c.b16 %v357, %v355
        %v382 = vpack.c.b16 %v360, %v358
        %v383 = vpack.c.b16 %v361, %v359
        %v384 = vpack.c.b16 %v364, %v362
        %v385 = vpack.c.b16 %v365, %v363
        %v386 = vpack.c.b16 %v368, %v366
        %v387 = vpack.c.b16 %v369, %v367
        %v388 = vpack.c.b16 %v372, %v370
        %v389 = vpack.c.b16 %v373, %v371
        %406 = vmatpush.bf16.msra.mxu0 %v388
        %407 = vmatpush.bf16.msra.mxu0 %v386
        %408 = vmatpush.bf16.msra.mxu0 %v384
        %409 = vmatpush.bf16.msra.mxu0 %v382
        %410 = vmatpush.bf16.msra.mxu0 %v380
        %411 = vmatpush.bf16.msra.mxu0 %v378
        %412 = vmatpush.bf16.msra.mxu0 %v376
        %413 = vmatpush.bf16.msra.mxu0 %v374
        %414 = vmatmul.bf16.gmra.mxu0 %v310
        %v415 = vpop.f32.mrf.mxu0
        %v416 = vadd.f32 0.0, %v415
        %v417 = vpop.f32.mrf.mxu0
        %v418 = vadd.f32 0.0, %v417
        %419 = vmatmul.bf16.gmra.mxu0 %v311
        %v420 = vpop.f32.mrf.mxu0
        %v421 = vadd.f32 0.0, %v420
        %v422 = vpop.f32.mrf.mxu0
        %v423 = vadd.f32 0.0, %v422
        %424 = vmatmul.bf16.gmra.mxu0 %v312
        %v425 = vpop.f32.mrf.mxu0
        %v426 = vadd.f32 0.0, %v425
        %v427 = vpop.f32.mrf.mxu0
        %v428 = vadd.f32 0.0, %v427
        %429 = vmatmul.bf16.gmra.mxu0 %v313
        %v430 = vpop.f32.mrf.mxu0
        %v431 = vadd.f32 0.0, %v430
        %v432 = vpop.f32.mrf.mxu0
        %v433 = vadd.f32 0.0, %v432
        %434 = vmatmul.bf16.gmra.mxu0 %v314
        %v435 = vpop.f32.mrf.mxu0
        %v436 = vadd.f32 0.0, %v435
        %v437 = vpop.f32.mrf.mxu0
        %v438 = vadd.f32 0.0, %v437
        %439 = vmatmul.bf16.gmra.mxu0 %v315
        %v440 = vpop.f32.mrf.mxu0
        %v441 = vadd.f32 0.0, %v440
        %v442 = vpop.f32.mrf.mxu0
        %v443 = vadd.f32 0.0, %v442
        %444 = vmatmul.bf16.gmra.mxu0 %v316
        %v445 = vpop.f32.mrf.mxu0
        %v446 = vadd.f32 0.0, %v445
        %v447 = vpop.f32.mrf.mxu0
        %v448 = vadd.f32 0.0, %v447
        %449 = vmatmul.bf16.gmra.mxu0 %v317
        %v450 = vpop.f32.mrf.mxu0
        %v451 = vadd.f32 0.0, %v450
        %v452 = vpop.f32.mrf.mxu0
        %v453 = vadd.f32 0.0, %v452
        %454 = vdwg.mxu0
        %455 = vmatpush.bf16.msra.mxu0 %v389
        %456 = vmatpush.bf16.msra.mxu0 %v387
        %457 = vmatpush.bf16.msra.mxu0 %v385
        %458 = vmatpush.bf16.msra.mxu0 %v383
        %459 = vmatpush.bf16.msra.mxu0 %v381
        %460 = vmatpush.bf16.msra.mxu0 %v379
        %461 = vmatpush.bf16.msra.mxu0 %v377
        %462 = vmatpush.bf16.msra.mxu0 %v375
        %463 = vmatmul.bf16.gmra.mxu0 %v310
        %v464 = vpop.f32.mrf.mxu0
        %v465 = vadd.f32 0.0, %v464
        %v466 = vpop.f32.mrf.mxu0
        %v467 = vadd.f32 0.0, %v466
        %468 = vmatmul.bf16.gmra.mxu0 %v311
        %v469 = vpop.f32.mrf.mxu0
        %v470 = vadd.f32 0.0, %v469
        %v471 = vpop.f32.mrf.mxu0
        %v472 = vadd.f32 0.0, %v471
        %473 = vmatmul.bf16.gmra.mxu0 %v312
        %v474 = vpop.f32.mrf.mxu0
        %v475 = vadd.f32 0.0, %v474
        %v476 = vpop.f32.mrf.mxu0
        %v477 = vadd.f32 0.0, %v476
        %478 = vmatmul.bf16.gmra.mxu0 %v313
        %v479 = vpop.f32.mrf.mxu0
        %v480 = vadd.f32 0.0, %v479
        %v481 = vpop.f32.mrf.mxu0
        %v482 = vadd.f32 0.0, %v481
        %483 = vmatmul.bf16.gmra.mxu0 %v314
        %v484 = vpop.f32.mrf.mxu0
        %v485 = vadd.f32 0.0, %v484
        %v486 = vpop.f32.mrf.mxu0
        %v487 = vadd.f32 0.0, %v486
        %488 = vmatmul.bf16.gmra.mxu0 %v315
        %v489 = vpop.f32.mrf.mxu0
        %v490 = vadd.f32 0.0, %v489
        %v491 = vpop.f32.mrf.mxu0
        %v492 = vadd.f32 0.0, %v491
        %493 = vmatmul.bf16.gmra.mxu0 %v316
        %v494 = vpop.f32.mrf.mxu0
        %v495 = vadd.f32 0.0, %v494
        %v496 = vpop.f32.mrf.mxu0
        %v497 = vadd.f32 0.0, %v496
        %498 = vmatmul.bf16.gmra.mxu0 %v317
        %v499 = vpop.f32.mrf.mxu0
        %v500 = vadd.f32 0.0, %v499
        %v501 = vpop.f32.mrf.mxu0
        %v502 = vadd.f32 0.0, %v501
        %503 = vdwg.mxu0
        %v504 = vpack.c.bf16 %v465, %v416
        %v505 = vpack.c.bf16 %v467, %v418
        %v506 = vpack.c.bf16 %v470, %v421
        %v507 = vpack.c.bf16 %v472, %v423
        %v508 = vpack.c.bf16 %v475, %v426
        %v509 = vpack.c.bf16 %v477, %v428
        %v510 = vpack.c.bf16 %v480, %v431
        %v511 = vpack.c.bf16 %v482, %v433
        %v512 = vpack.c.bf16 %v485, %v436
        %v513 = vpack.c.bf16 %v487, %v438
        %v514 = vpack.c.bf16 %v490, %v441
        %v515 = vpack.c.bf16 %v492, %v443
        %v516 = vpack.c.bf16 %v495, %v446
        %v517 = vpack.c.bf16 %v497, %v448
        %v518 = vpack.c.bf16 %v500, %v451
        %v519 = vpack.c.bf16 %v502, %v453
        %520 = vst [vmem:[%s228] sm:$0xff] %v504
        %521 = vst [vmem:[%s228 + $0x8] sm:$0xff] %v505
        %522 = vst [vmem:[%s228 + $0x10] sm:$0xff] %v506
        %523 = vst [vmem:[%s228 + $0x18] sm:$0xff] %v507
        %524 = vst [vmem:[%s228 + $0x20] sm:$0xff] %v508
        %525 = vst [vmem:[%s228 + $0x28] sm:$0xff] %v509
        %526 = vst [vmem:[%s228 + $0x30] sm:$0xff] %v510
        %527 = vst [vmem:[%s228 + $0x38] sm:$0xff] %v511
        %528 = vst [vmem:[%s228 + $0x40] sm:$0xff] %v512
        %529 = vst [vmem:[%s228 + $0x48] sm:$0xff] %v513
        %530 = vst [vmem:[%s228 + $0x50] sm:$0xff] %v514
        %531 = vst [vmem:[%s228 + $0x58] sm:$0xff] %v515
        %532 = vst [vmem:[%s228 + $0x60] sm:$0xff] %v516
        %533 = vst [vmem:[%s228 + $0x68] sm:$0xff] %v517
        %534 = vst [vmem:[%s228 + $0x70] sm:$0xff] %v518
        %535 = vst [vmem:[%s228 + $0x78] sm:$0xff] %v519
        %v536 = vadd.f32 %v416, %v418
        %v537 = vadd.f32 %v536, %v421
        %v538 = vadd.f32 %v537, %v423
        %v539 = vadd.f32 %v538, %v426
        %v540 = vadd.f32 %v539, %v428
        %v541 = vadd.f32 %v540, %v431
        %v542 = vadd.f32 %v541, %v433
        %v543 = vadd.f32 %v542, %v436
        %v544 = vadd.f32 %v543, %v438
        %v545 = vadd.f32 %v544, %v441
        %v546 = vadd.f32 %v545, %v443
        %v547 = vadd.f32 %v546, %v446
        %v548 = vadd.f32 %v547, %v448
        %v549 = vadd.f32 %v548, %v451
        %v550 = vadd.f32 %v549, %v453
        %v551 = vrot.slane %v550, 4
        %v552 = vadd.f32 %v550, %v551
        %v553 = vrot.slane %v552, 2
        %v554 = vadd.f32 %v552, %v553
        %v555 = vrot.slane %v554, 1
        %v556 = vadd.f32 %v554, %v555
        %v557 = vadd.f32 %v465, %v467
        %v558 = vadd.f32 %v557, %v470
        %v559 = vadd.f32 %v558, %v472
        %v560 = vadd.f32 %v559, %v475
        %v561 = vadd.f32 %v560, %v477
        %v562 = vadd.f32 %v561, %v480
        %v563 = vadd.f32 %v562, %v482
        %v564 = vadd.f32 %v563, %v485
        %v565 = vadd.f32 %v564, %v487
        %v566 = vadd.f32 %v565, %v490
        %v567 = vadd.f32 %v566, %v492
        %v568 = vadd.f32 %v567, %v495
        %v569 = vadd.f32 %v568, %v497
        %v570 = vadd.f32 %v569, %v500
        %v571 = vadd.f32 %v570, %v502
        %v572 = vrot.slane %v571, 4
        %v573 = vadd.f32 %v571, %v572
        %v574 = vrot.slane %v573, 2
        %v575 = vadd.f32 %v573, %v574
        %v576 = vrot.slane %v575, 1
        %v577 = vadd.f32 %v575, %v576
        %v578 = vmul.f32 %v416, %v416
        %v579 = vmul.f32 %v465, %v465
        %v580 = vmul.f32 %v418, %v418
        %v581 = vmul.f32 %v467, %v467
        %v582 = vmul.f32 %v421, %v421
        %v583 = vmul.f32 %v470, %v470
        %v584 = vmul.f32 %v423, %v423
        %v585 = vmul.f32 %v472, %v472
        %v586 = vmul.f32 %v426, %v426
        %v587 = vmul.f32 %v475, %v475
        %v588 = vmul.f32 %v428, %v428
        %v589 = vmul.f32 %v477, %v477
        %v590 = vmul.f32 %v431, %v431
        %v591 = vmul.f32 %v480, %v480
        %v592 = vmul.f32 %v433, %v433
        %v593 = vmul.f32 %v482, %v482
        %v594 = vmul.f32 %v436, %v436
        %v595 = vmul.f32 %v485, %v485
        %v596 = vmul.f32 %v438, %v438
        %v597 = vmul.f32 %v487, %v487
        %v598 = vmul.f32 %v441, %v441
        %v599 = vmul.f32 %v490, %v490
        %v600 = vmul.f32 %v443, %v443
        %v601 = vmul.f32 %v492, %v492
        %v602 = vmul.f32 %v446, %v446
        %v603 = vmul.f32 %v495, %v495
        %v604 = vmul.f32 %v448, %v448
        %v605 = vmul.f32 %v497, %v497
        %v606 = vmul.f32 %v451, %v451
        %v607 = vmul.f32 %v500, %v500
        %v608 = vmul.f32 %v453, %v453
        %v609 = vmul.f32 %v502, %v502
        %v610 = vadd.f32 %v578, %v580
        %v611 = vadd.f32 %v610, %v582
        %v612 = vadd.f32 %v611, %v584
        %v613 = vadd.f32 %v612, %v586
        %v614 = vadd.f32 %v613, %v588
        %v615 = vadd.f32 %v614, %v590
        %v616 = vadd.f32 %v615, %v592
        %v617 = vadd.f32 %v616, %v594
        %v618 = vadd.f32 %v617, %v596
        %v619 = vadd.f32 %v618, %v598
        %v620 = vadd.f32 %v619, %v600
        %v621 = vadd.f32 %v620, %v602
        %v622 = vadd.f32 %v621, %v604
        %v623 = vadd.f32 %v622, %v606
        %v624 = vadd.f32 %v623, %v608
        %v625 = vrot.slane %v624, 4
        %v626 = vadd.f32 %v624, %v625
        %v627 = vrot.slane %v626, 2
        %v628 = vadd.f32 %v626, %v627
        %v629 = vrot.slane %v628, 1
        %v630 = vadd.f32 %v628, %v629
        %v631 = vadd.f32 %v579, %v581
        %v632 = vadd.f32 %v631, %v583
        %v633 = vadd.f32 %v632, %v585
        %v634 = vadd.f32 %v633, %v587
        %v635 = vadd.f32 %v634, %v589
        %v636 = vadd.f32 %v635, %v591
        %v637 = vadd.f32 %v636, %v593
        %v638 = vadd.f32 %v637, %v595
        %v639 = vadd.f32 %v638, %v597
        %v640 = vadd.f32 %v639, %v599
        %v641 = vadd.f32 %v640, %v601
        %v642 = vadd.f32 %v641, %v603
        %v643 = vadd.f32 %v642, %v605
        %v644 = vadd.f32 %v643, %v607
        %v645 = vadd.f32 %v644, %v609
        %v646 = vrot.slane %v645, 4
        %v647 = vadd.f32 %v645, %v646
        %v648 = vrot.slane %v647, 2
        %v649 = vadd.f32 %v647, %v648
        %v650 = vrot.slane %v649, 1
        %v651 = vadd.f32 %v649, %v650
        %v652 = vlaneseq
        %v653 = vshrl.u32 %v652, 7
        %v654 = vld [vmem:[%s235] sm:$0xff]
        %v655 = vld [vmem:[%s235 + $0x8] sm:$0xff]
        %vm656 = vcmp.eq.s32.totalorder %v653, 0
        %vm657 = vcmp.eq.s32.totalorder %v653, 1
        %v658 = vsel %vm657, %v630, 0.0
        %v659 = vsel %vm657, %v651, 0.0
        %v660 = vsel %vm656, %v556, %v658
        %v661 = vsel %vm656, %v577, %v659
        %v662 = vadd.f32 %v654, %v660
        %v663 = vadd.f32 %v655, %v661
        %664 = vst [vmem:[%s235] sm:$0xff] %v662
        %665 = vst [vmem:[%s235 + $0x8] sm:$0xff] %v663
        %s666 = sand.u32 %s96, 1
        %s667 = scalar_lea.sflag [#allocation4], %s666
        %s668 = sand.u32 %s96, 1
        %s669 = smul.addr %s668, 128
        %s670 = scalar_lea.vmem [#allocation7], %s669
        %s671 = sand.u32 %s122, 1
        %s672 = scalar_lea.sflag [#allocation9], %s671
        %s673 = sand.u32 %s122, 1
        %s674 = smul.addr %s673, 16
        %s675 = scalar_lea.vmem [#allocation8], %s674
        // Predicated region
        $region41: #{tpu_custom_call.1} parent=27 // pred_check
          %p676 = pneg %p106
        $region42: #{tpu_custom_call.1} parent=27 // pred_check_branch
          %678 = sbr.rel (%p676) target = $region44
        $region43: #{tpu_custom_call.1} parent=27 // pred_region
          %s679 = sadd.s32 %s29, %s30
          %s680 = smul.u32 16, %s679
          %682 = vsyncadd %s667, 0
          %s683 = smul.addr %s680, 2
          %s684 = smul.addr %s683, 4
          %s685 = scalar_lea.hbm %s2, %s684
          %s686 = sshll.u32 %s670, 4
          %s687 = int_to_ptr.vmem [resolvable:$true] %s686
          %s688 = sshll.u32 %s685, 4
          %s689 = int_to_ptr.hbm [resolvable:$true] %s688
          %694 = dma.vmem_to_hbm [thread:$0]  %s687, 2048, %s689, %s667, 128, 128, 8
        $region44: #{tpu_custom_call.1} parent=27 // pred_fallthru
          _
        // Predicated region
        $region45: #{tpu_custom_call.1} parent=27 // pred_check
          %p695 = pneg %p132
        $region46: #{tpu_custom_call.1} parent=27 // pred_check_branch
          %697 = sbr.rel (%p695) target = $region48
        $region47: #{tpu_custom_call.1} parent=27 // pred_region
          %699 = vsyncadd %s672, 0
          %s700 = smul.addr %s29, 2
          %s701 = smul.addr %s700, 8
          %s702 = scalar_lea.hbm %s3, %s701
          %s704 = sshll.u32 %s675, 4
          %s705 = int_to_ptr.vmem [resolvable:$true] %s704
          %s706 = sshll.u32 %s702, 4
          %s707 = int_to_ptr.hbm [resolvable:$true] %s706
          %709 = dma.vmem_to_hbm [thread:$0]  %s705, 256, %s707, %s672
        $region48: #{tpu_custom_call.1} parent=27 // pred_fallthru
          _
      $region28: #{tpu_custom_call.1} parent=5 // pred_fallthru
        _
      %p710 = scmp.le.s32.totalorder 2, %s20
      // Predicated region
      $region49: #{tpu_custom_call.1} parent=5 // pred_check
        %p711 = pneg %p710
      $region50: #{tpu_custom_call.1} parent=5 // pred_check_branch
        %713 = sbr.rel (%p711) target = $region52
      $region51: #{tpu_custom_call.1} parent=5 // pred_region
        %s714 = ssub.s32 %s20, 2
        // Predicated region
        $region53: #{tpu_custom_call.1} parent=51 // pred_check
          %p715 = pneg %p112
        $region54: #{tpu_custom_call.1} parent=51 // pred_check_branch
          %717 = sbr.rel (%p715) target = $region56
        $region55: #{tpu_custom_call.1} parent=51 // pred_region
          %s718 = sand.u32 %s97, 1
          %s719 = scalar_lea.sflag [#allocation4], %s718
          %s720 = sand.u32 %s97, 1
          %s721 = smul.addr %s720, 128
          %s722 = scalar_lea.vmem [#allocation7], %s721
          %724 = dma.done %s719, 2048
        $region56: #{tpu_custom_call.1} parent=51 // pred_fallthru
          _
        // Predicated region
        $region57: #{tpu_custom_call.1} parent=51 // pred_check
          %p725 = pneg %p138
        $region58: #{tpu_custom_call.1} parent=51 // pred_check_branch
          %727 = sbr.rel (%p725) target = $region60
        $region59: #{tpu_custom_call.1} parent=51 // pred_region
          %s728 = sand.u32 %s123, 1
          %s729 = scalar_lea.sflag [#allocation9], %s728
          %s730 = sand.u32 %s123, 1
          %s731 = smul.addr %s730, 16
          %s732 = scalar_lea.vmem [#allocation8], %s731
          %734 = dma.done %s729, 256
        $region60: #{tpu_custom_call.1} parent=51 // pred_fallthru
          _
      $region52: #{tpu_custom_call.1} parent=5 // pred_fallthru
        _
    $region6: #{tpu_custom_call.1} parent=1 // loop_footer
      %s24 = sadd.s32 1, %s20
    $region7: #{tpu_custom_call.1} parent=1 // loop_footer_branch
      %19 = sbr.rel target = $region3
    $region8: #{tpu_custom_call.1} parent=1 // loop_exit
      _
    %735 = vsyncpa [#allocation3], 1
    %s736 = scalar_lea.sflag [#allocation3], 1
    %737 = vsyncpa %s736, 1
    %738 = vsyncpa [#allocation6], 1
    %739 = vsyncpa [#allocation4], 1
    %s740 = scalar_lea.sflag [#allocation4], 1
    %741 = vsyncpa %s740, 1
    %742 = vsyncpa [#allocation9], 1
    %s743 = scalar_lea.sflag [#allocation9], 1
    %744 = vsyncpa %s743, 1

</llo_original>
